<compile_context>
chip_gen: v7x
topology: tpu7x:2x2x1
jax: 0.10.0
libtpu: 0.0.40
codegen_flags: <defaults>
</compile_context>

<pallas_src>
import functools

import jax
import jax.numpy as jnp
from jax.experimental import pallas as pl
from jax.experimental.pallas import tpu as pltpu

_LANES = 128   # vreg lane width
_SUB = 512     # in-kernel sub-slice rows (bounds the lane-padded hidden activation)


def _round_up(x, m):
    return -(-x // m) * m


def _channel_attention_kernel(f_ref, w1_ref, w2_ref, o_ref, *, sub, n_full, rem):
    """One grid step: o = sigmoid(relu(f @ w1) @ w2) * f.

    The [tr, L] feature block is processed in fixed `sub`-row slices so the
    hidden activation (only `hid` useful lanes, padded to 128 in vregs/VMEM)
    never costs more than ~sub*128*4 bytes regardless of the block size.
    """
    w1 = w1_ref[...]
    w2 = w2_ref[...]

    def process(start, size):
        f = f_ref[pl.ds(start, size), :].astype(jnp.float32)
        h = jnp.maximum(jnp.dot(f, w1, preferred_element_type=jnp.float32), 0.0)
        o = jnp.dot(h, w2, preferred_element_type=jnp.float32)
        # sigmoid(x) == 0.5 * (1 + tanh(x / 2)) : single EUP op per element.
        gate = 0.5 * (1.0 + jnp.tanh(0.5 * o))
        o_ref[pl.ds(start, size), :] = (gate * f).astype(o_ref.dtype)

    def body(i, carry):
        process(pl.multiple_of(i * sub, sub), sub)
        return carry

    jax.lax.fori_loop(0, n_full, body, 0, unroll=True)
    if rem:                          # static remainder, multiple of 8 sublanes
        process(n_full * sub, rem)


def sparse_channel_attention_2d(features, w1, w2, *, tile_rows=8192):
    """features: [N, C]; w1: [C, C//16]; w2: [C//16, C] -> [N, C]."""
    N, C = features.shape
    Ch = w1.shape[1]
    in_dtype = features.dtype

    # Fold the duplicated avg/max branch: sigmoid(o + o) == sigmoid(h @ (2*w2)).
    # Exact in f32 (power-of-two scale).
    w1 = w1.astype(jnp.float32)
    w2 = (2.0 * w2).astype(jnp.float32)

    # ---- lane-dense packing: present features as [rows, 128] ----------------
    if C < _LANES and _LANES % C == 0:
        pack = _LANES // C
        rows = pl.cdiv(N, pack)          # packed rows needed (before row padding)
        L = _LANES
        hid = pack * Ch
        # Block-diagonal replicated weights keep the packed lane groups
        # independent, so no in-kernel reshape/relayout is needed.
        w1m = jnp.zeros((L, hid), jnp.float32)
        w2m = jnp.zeros((hid, L), jnp.float32)
        for p in range(pack):
            w1m = w1m.at[p * C:(p + 1) * C, p * Ch:(p + 1) * Ch].set(w1)
            w2m = w2m.at[p * Ch:(p + 1) * Ch, p * C:(p + 1) * C].set(w2)
    else:
        pack, rows, L, hid = 1, N, C, Ch
        w1m, w2m = w1, w2

    # ---- tiling: big mem-bound blocks, even grid >= 2 steps, full tiles -----
    nsteps = max(1, pl.cdiv(rows, tile_rows))
    if nsteps == 1 and rows > 16:
        nsteps = 2                       # engage both v7x TensorCores
    if nsteps > 1 and nsteps % 2:
        nsteps += 1                      # even step count balances the 2 TCs
    tr = _round_up(pl.cdiv(rows, nsteps), 8)
    rows_pad = tr * nsteps               # every grid step is a full tile
    n_pad = rows_pad * pack              # voxel rows after padding

    fmat = features
    if n_pad != N:
        # Zero padding is harmless: sigmoid(.)*0 == 0 and it is sliced off below.
        fmat = jnp.pad(fmat, ((0, n_pad - N), (0, 0)))
    fmat = fmat.reshape(rows_pad, L)     # contiguous reshape, no data movement

    sub = min(_SUB, tr)
    n_full, rem = tr // sub, tr % sub    # rem is a multiple of 8

    itemsize = jnp.dtype(in_dtype).itemsize
    cost = pl.CostEstimate(
        flops=4 * rows_pad * L * hid + 4 * rows_pad * L,   # fc1 + fc2 + elementwise
        transcendentals=rows_pad * L,                      # one tanh per element
        bytes_accessed=2 * rows_pad * L * itemsize + (w1m.size + w2m.size) * 4,
    )

    kernel = functools.partial(_channel_attention_kernel,
                               sub=sub, n_full=n_full, rem=rem)

    out = pl.pallas_call(
        kernel,
        out_shape=jax.ShapeDtypeStruct((rows_pad, L), in_dtype),
        grid_spec=pltpu.PrefetchScalarGridSpec(
            num_scalar_prefetch=0,
            grid=(nsteps,),
            in_specs=[
                pl.BlockSpec((tr, L), lambda i: (i, 0)),    # feature tile
                pl.BlockSpec((L, hid), lambda i: (0, 0)),   # fc1 weight, resident
                pl.BlockSpec((hid, L), lambda i: (0, 0)),   # fc2 weight (x2), resident
            ],
            out_specs=pl.BlockSpec((tr, L), lambda i: (i, 0)),
        ),
        compiler_params=pltpu.CompilerParams(
            dimension_semantics=("parallel",),
            vmem_limit_bytes=32 * 1024 * 1024,
        ),
        cost_estimate=cost,
    )(fmat, w1m, w2m)

    return out.reshape(-1, C)[:N]


def _reference(features, w1, w2):
    h = jnp.maximum(features @ w1, 0.0)
    o = h @ w2
    return jax.nn.sigmoid(o + o) * features


if __name__ == "__main__":
    key = jax.random.PRNGKey(0)

    # in_planes must be divisible by 16 (fc1 has in_planes // 16 channels).
    B, C, H, W = 2, 64, 16, 16
    hidden = C // 16

    kx, k1, k2 = jax.random.split(key, 3)
    x_nchw = jax.random.normal(kx, (B, C, H, W), dtype=jnp.float32)

    # SubMConv2d(kernel_size=1, bias=False) weights, deterministic init.
    w1 = jax.random.normal(k1, (C, hidden), dtype=jnp.float32) * (1.0 / jnp.sqrt(C))
    w2 = jax.random.normal(k2, (hidden, C), dtype=jnp.float32) * (1.0 / jnp.sqrt(hidden))

    # Dense NCHW -> sparse feature matrix [N, C] with every voxel active.
    # (spconv indices bookkeeping is identity glue for 1x1 ops.)
    features = jnp.transpose(x_nchw, (0, 2, 3, 1)).reshape(-1, C)

    out = jax.block_until_ready(sparse_channel_attention_2d(features, w1, w2))

    ref = _reference(features, w1, w2)
    assert jnp.allclose(out, ref, atol=1e-5, rtol=1e-5), "mismatch vs reference"

    # Back to NCHW (glue only; not part of the hot path).
    out_nchw = jnp.transpose(out.reshape(B, H, W, C), (0, 3, 1, 2))
    jax.block_until_ready(out_nchw)
    print("KERNEL_OK")
</pallas_src>

<mosaic_0001>
module attributes {stable_mosaic.version = 11 : i64} {
  func.func @_channel_attention_kernel(%arg0: i32, %arg1: memref<128x128xf32, #tpu.memory_space<vmem>>, %arg2: memref<128x8xf32, #tpu.memory_space<vmem>>, %arg3: memref<8x128xf32, #tpu.memory_space<vmem>>, %arg4: memref<128x128xf32, #tpu.memory_space<vmem>>) attributes {dimension_semantics = [#tpu.dimension_semantics<parallel>], iteration_bounds = array<i64: 2>, scalar_prefetch = 0 : i64, scratch_operands = 0 : i64, tpu.core_type = #tpu.core_type<tc>, window_params = [{transform_indices = @transform_0, window_bounds = array<i64: 128, 128>}, {pipeline_mode = #tpu.pipeline_mode<synchronous>, transform_indices = @transform_1, window_bounds = array<i64: 128, 8>}, {pipeline_mode = #tpu.pipeline_mode<synchronous>, transform_indices = @transform_2, window_bounds = array<i64: 8, 128>}, {transform_indices = @transform_3, window_bounds = array<i64: 128, 128>}]} {
    %c0 = arith.constant 0 : index
    %c0_0 = arith.constant 0 : index
    %0 = vector.load %arg2[%c0, %c0_0] : memref<128x8xf32, #tpu.memory_space<vmem>>, vector<128x8xf32>
    %c0_1 = arith.constant 0 : index
    %c0_2 = arith.constant 0 : index
    %1 = vector.load %arg3[%c0_1, %c0_2] : memref<8x128xf32, #tpu.memory_space<vmem>>, vector<8x128xf32>
    %c0_i32 = arith.constant 0 : i32
    %c128_i32 = arith.constant 128 : i32
    %2 = arith.muli %c0_i32, %c128_i32 : i32
    %3 = tpu.assume_multiple %2, 128 : i32
    %4 = arith.index_cast %3 : i32 to index
    %c0_3 = arith.constant 0 : index
    %5 = vector.load %arg1[%4, %c0_3] : memref<128x128xf32, #tpu.memory_space<vmem>>, vector<128x128xf32>
    %cst = arith.constant dense<0.000000e+00> : vector<128x8xf32>
    %6 = tpu.matmul %5, %0, %cst {dimension_numbers = #tpu.dot_dimension_numbers<[1], [0], [0], [1], [0, 0, 1, 1], [], []>} : vector<128x128xf32>, vector<128x8xf32>, vector<128x8xf32> -> vector<128x8xf32>
    %cst_4 = arith.constant 0.000000e+00 : f32
    %7 = vector.broadcast %cst_4 : f32 to vector<128x8xf32>
    %8 = arith.maximumf %6, %7 : vector<128x8xf32>
    %cst_5 = arith.constant dense<0.000000e+00> : vector<128x128xf32>
    %9 = tpu.matmul %8, %1, %cst_5 {dimension_numbers = #tpu.dot_dimension_numbers<[1], [0], [0], [1], [0, 0, 1, 1], [], []>} : vector<128x8xf32>, vector<8x128xf32>, vector<128x128xf32> -> vector<128x128xf32>
    %cst_6 = arith.constant 5.000000e-01 : f32
    %10 = vector.broadcast %cst_6 : f32 to vector<128x128xf32>
    %11 = arith.mulf %10, %9 : vector<128x128xf32>
    %12 = math.tanh %11 : vector<128x128xf32>
    %cst_7 = arith.constant 1.000000e+00 : f32
    %13 = vector.broadcast %cst_7 : f32 to vector<128x128xf32>
    %14 = arith.addf %13, %12 : vector<128x128xf32>
    %cst_8 = arith.constant 5.000000e-01 : f32
    %15 = vector.broadcast %cst_8 : f32 to vector<128x128xf32>
    %16 = arith.mulf %15, %14 : vector<128x128xf32>
    %17 = arith.mulf %16, %5 : vector<128x128xf32>
    %18 = arith.index_cast %3 : i32 to index
    %c0_9 = arith.constant 0 : index
    %19 = vector.load %arg4[%18, %c0_9] : memref<128x128xf32, #tpu.memory_space<vmem>>, vector<128x128xf32>
    tpu.vector_store %arg4[%18, %c0_9], %17 {strides = array<i32>} : memref<128x128xf32, #tpu.memory_space<vmem>>, vector<128x128xf32>,
    %c1_i32 = arith.constant 1 : i32
    return
  }
  func.func @transform_0(%arg0: i32) -> (i32, i32) {
    %c0_i32 = arith.constant 0 : i32
    %c0_i32_0 = arith.constant 0 : i32
    return %arg0, %c0_i32 : i32, i32
  }
  func.func @transform_1(%arg0: i32) -> (i32, i32) {
    %c0_i32 = arith.constant 0 : i32
    %c0_i32_0 = arith.constant 0 : i32
    %c0_i32_1 = arith.constant 0 : i32
    return %c0_i32, %c0_i32_0 : i32, i32
  }
  func.func @transform_2(%arg0: i32) -> (i32, i32) {
    %c0_i32 = arith.constant 0 : i32
    %c0_i32_0 = arith.constant 0 : i32
    %c0_i32_1 = arith.constant 0 : i32
    return %c0_i32, %c0_i32_0 : i32, i32
  }
  func.func @transform_3(%arg0: i32) -> (i32, i32) {
    %c0_i32 = arith.constant 0 : i32
    %c0_i32_0 = arith.constant 0 : i32
    return %arg0, %c0_i32 : i32, i32
  }
}

</mosaic_0001>

<llo_original>
// kernel: tpu_custom_call.1
$region0: #{tpu_custom_call.1}
  #allocation0 [shape = 'u32[]', space=smem, size = 0x4, offset = 0x4, fixed_abs, tag = 'smem constant byte address 0x4 - core index']
  #allocation1 [shape = 'u32[144,128]{1,0:T(1,128)}', space=vmem, size = 0x12000, scoped, tag = 'internal scratch']
  %s0 = inlined_call_operand.hbm [shape: f32[256,128], index: 0, kind: input, shape index: {}]
  %s1 = inlined_call_operand.vmem [shape: f32[128,8], index: 1, kind: input, shape index: {}]
  %s2 = inlined_call_operand.vmem [shape: f32[8,128], index: 2, kind: input, shape index: {}]
  %s3 = inlined_call_operand.hbm [shape: f32[256,128], index: 3, kind: output, shape index: {}]
  %s4 = sld [smem:[#allocation0]]
  $region49: #{tpu_custom_call.1} parent=0
    _
  %s6 = ssub.s32 1, %s4
  %s7 = scalar_select 0, %s6, %s4
  $region1: #{tpu_custom_call.1} parent=0
    #allocation2 [shape = 'u8[131072]{0}', space=vmem, size = 0x20000, scoped, tag = 'input window, operand 0']
    #allocation3 [shape = 's32[2]{0}', space=sflag, size = 0x8, scoped, tag = 'scoped memory for tpu_custom_call.1']
    #allocation4 [shape = 's32[2]{0}', space=sflag, size = 0x8, scoped, tag = 'scoped memory for tpu_custom_call.1']
    #allocation5 [shape = 'u8[131072]{0}', space=vmem, size = 0x20000, scoped, tag = 'output window, operand 0']
    %8 = vsyncpa [#allocation3], 0
    %s9 = scalar_lea.sflag [#allocation3], 1
    %10 = vsyncpa %s9, 0
    %11 = vsyncpa [#allocation4], 0
    %s12 = scalar_lea.sflag [#allocation4], 1
    %13 = vsyncpa %s12, 0
    loop: start=0, step=1, limit=4
    $region2: #{tpu_custom_call.1} parent=1 // loop_pre_header
      _
    $region3: #{tpu_custom_call.1} parent=1 // loop_header
      %s15 = sphi 0, %s19
      %p16 = scmp.ge.s32.totalorder %s15, 4
      %s25 = sphi 0, %s27
      %s28 = sphi 0, %s25
      %s29 = sphi 0, %s28
      %s45 = sphi 0, %s29
      %s49 = sphi 0, %s49
      %s51 = sphi 0, %s49
      %s52 = sphi 0, %s51
      %s66 = sphi 0, %s52
      %s70 = sphi 0, %s70
      %s72 = sphi 0, %s70
      %s73 = sphi 0, %s72
      %s87 = sphi 0, %s73
      %s93 = sphi 0, %s95
      %s96 = sphi 0, %s93
      %s97 = sphi 0, %s96
      %s113 = sphi 0, %s97
    $region4: #{tpu_custom_call.1} parent=1 // loop_header_branch
      %18 = sbr.rel (%p16) target = $region8
    $region5: #{tpu_custom_call.1} parent=1 // loop_body
      %s20 = ssub.s32 %s15, 1
      %s21 = ssub.s32 %s15, 2
      %s22 = sadd.s32 %s15, 1
      %s23 = ssub.s32 %s15, %s22
      %p24 = scmp.eq.s32.totalorder %s23, 0
      %s26 = sadd.s32 %s25, 1
      %s27 = scalar_select %p24, %s25, %s26
      %p30 = pneg %p24
      %p31 = scmp.eq.s32.totalorder %s15, 1
      %p32 = por %p30, %p31
      %p33 = scmp.ne.s32.totalorder %s25, %s28
      %p34 = scmp.eq.s32.totalorder %s15, 0
      %p35 = por %p33, %p34
      %p36 = scmp.ne.s32.totalorder %s25, %s28
      %p37 = scmp.eq.s32.totalorder %s20, 1
      %p38 = por %p36, %p37
      %p39 = scmp.ne.s32.totalorder %s28, %s29
      %p40 = scmp.eq.s32.totalorder %s20, 0
      %p41 = por %p39, %p40
      %p42 = scmp.ne.s32.totalorder %s28, %s29
      %p43 = scmp.eq.s32.totalorder %s21, 1
      %p44 = por %p42, %p43
      %p46 = scmp.ne.s32.totalorder %s29, %s45
      %p47 = scmp.eq.s32.totalorder %s21, 0
      %p48 = por %p46, %p47
      %s50 = sadd.s32 %s49, 1
      %p53 = scmp.eq.s32.totalorder %s15, 1
      %p54 = scmp.ne.s32.totalorder %s49, %s51
      %p55 = scmp.eq.s32.totalorder %s15, 0
      %p56 = por %p54, %p55
      %p57 = scmp.ne.s32.totalorder %s49, %s51
      %p58 = scmp.eq.s32.totalorder %s20, 1
      %p59 = por %p57, %p58
      %p60 = scmp.ne.s32.totalorder %s51, %s52
      %p61 = scmp.eq.s32.totalorder %s20, 0
      %p62 = por %p60, %p61
      %p63 = scmp.ne.s32.totalorder %s51, %s52
      %p64 = scmp.eq.s32.totalorder %s21, 1
      %p65 = por %p63, %p64
      %p67 = scmp.ne.s32.totalorder %s52, %s66
      %p68 = scmp.eq.s32.totalorder %s21, 0
      %p69 = por %p67, %p68
      %s71 = sadd.s32 %s70, 1
      %p74 = scmp.eq.s32.totalorder %s15, 1
      %p75 = scmp.ne.s32.totalorder %s70, %s72
      %p76 = scmp.eq.s32.totalorder %s15, 0
      %p77 = por %p75, %p76
      %p78 = scmp.ne.s32.totalorder %s70, %s72
      %p79 = scmp.eq.s32.totalorder %s20, 1
      %p80 = por %p78, %p79
      %p81 = scmp.ne.s32.totalorder %s72, %s73
      %p82 = scmp.eq.s32.totalorder %s20, 0
      %p83 = por %p81, %p82
      %p84 = scmp.ne.s32.totalorder %s72, %s73
      %p85 = scmp.eq.s32.totalorder %s21, 1
      %p86 = por %p84, %p85
      %p88 = scmp.ne.s32.totalorder %s73, %s87
      %p89 = scmp.eq.s32.totalorder %s21, 0
      %p90 = por %p88, %p89
      %s91 = ssub.s32 %s15, %s22
      %p92 = scmp.eq.s32.totalorder %s91, 0
      %s94 = sadd.s32 %s93, 1
      %s95 = scalar_select %p92, %s93, %s94
      %p98 = pneg %p92
      %p99 = scmp.eq.s32.totalorder %s15, 1
      %p100 = por %p98, %p99
      %p101 = scmp.ne.s32.totalorder %s93, %s96
      %p102 = scmp.eq.s32.totalorder %s15, 0
      %p103 = por %p101, %p102
      %p104 = scmp.ne.s32.totalorder %s93, %s96
      %p105 = scmp.eq.s32.totalorder %s20, 1
      %p106 = por %p104, %p105
      %p107 = scmp.ne.s32.totalorder %s96, %s97
      %p108 = scmp.eq.s32.totalorder %s20, 0
      %p109 = por %p107, %p108
      %p110 = scmp.ne.s32.totalorder %s96, %s97
      %p111 = scmp.eq.s32.totalorder %s21, 1
      %p112 = por %p110, %p111
      %p114 = scmp.ne.s32.totalorder %s97, %s113
      %p115 = scmp.eq.s32.totalorder %s21, 0
      %p116 = por %p114, %p115
      %p117 = scmp.le.s32.totalorder 1, %s15
      %p118 = scmp.lt.s32.totalorder %s15, 3
      %p119 = pnand %p117, %p118
      %p120 = pneg %p119
      // Predicated region
      $region9: #{tpu_custom_call.1} parent=5 // pred_check
        _
      $region10: #{tpu_custom_call.1} parent=5 // pred_check_branch
        %122 = sbr.rel (%p119) target = $region12
      $region11: #{tpu_custom_call.1} parent=5 // pred_region
        %s123 = ssub.s32 %s15, 1
        // Predicated region
        $region13: #{tpu_custom_call.1} parent=11 // pred_check
          %p124 = pneg %p62
        $region14: #{tpu_custom_call.1} parent=11 // pred_check_branch
          %126 = sbr.rel (%p124) target = $region16
        $region15: #{tpu_custom_call.1} parent=11 // pred_region
          _
        $region16: #{tpu_custom_call.1} parent=11 // pred_fallthru
          _
        // Predicated region
        $region17: #{tpu_custom_call.1} parent=11 // pred_check
          %p127 = pneg %p83
        $region18: #{tpu_custom_call.1} parent=11 // pred_check_branch
          %129 = sbr.rel (%p127) target = $region20
        $region19: #{tpu_custom_call.1} parent=11 // pred_region
          _
        $region20: #{tpu_custom_call.1} parent=11 // pred_fallthru
          _
      $region12: #{tpu_custom_call.1} parent=5 // pred_fallthru
        _
      %p130 = scmp.lt.s32.totalorder %s15, 2
      // Predicated region
      $region21: #{tpu_custom_call.1} parent=5 // pred_check
        %p131 = pneg %p130
      $region22: #{tpu_custom_call.1} parent=5 // pred_check_branch
        %133 = sbr.rel (%p131) target = $region24
      $region23: #{tpu_custom_call.1} parent=5 // pred_region
        // Predicated region
        $region25: #{tpu_custom_call.1} parent=23 // pred_check
          %p134 = pneg %p35
        $region26: #{tpu_custom_call.1} parent=23 // pred_check_branch
          %136 = sbr.rel (%p134) target = $region28
        $region27: #{tpu_custom_call.1} parent=23 // pred_region
          %s137 = sand.u32 %s25, 1
          %s138 = scalar_lea.sflag [#allocation3], %s137
          %s139 = sand.u32 %s25, 1
          %s140 = smul.addr %s139, 128
          %s141 = scalar_lea.vmem [#allocation2], %s140
          %s142 = smul.u32 16, %s15
          %s144 = ssub.s32 2048, 2048
          %145 = vsyncadd %s138, %s144
          %s146 = smul.addr %s142, 128
          %s147 = scalar_lea.hbm %s0, %s146
          %s148 = sshll.u32 %s141, 4
          %s149 = int_to_ptr.vmem [resolvable:$true] %s148
          %154 = dma.hbm_to_vmem [thread:$0]  %s147, 2048, %s149, %s138, 128, 128, 8
        $region28: #{tpu_custom_call.1} parent=23 // pred_fallthru
          _
      $region24: #{tpu_custom_call.1} parent=5 // pred_fallthru
        _
      %p155 = scmp.le.s32.totalorder 1, %s15
      %p156 = scmp.lt.s32.totalorder %s15, 3
      %p157 = pnand %p155, %p156
      %p158 = pneg %p157
      // Predicated region
      $region29: #{tpu_custom_call.1} parent=5 // pred_check
        _
      $region30: #{tpu_custom_call.1} parent=5 // pred_check_branch
        %160 = sbr.rel (%p157) target = $region32
      $region31: #{tpu_custom_call.1} parent=5 // pred_region
        %s161 = ssub.s32 %s15, 1
        %s162 = sand.u32 %s28, 1
        %s163 = scalar_lea.sflag [#allocation3], %s162
        %s164 = sand.u32 %s28, 1
        %s165 = smul.addr %s164, 128
        %s166 = scalar_lea.vmem [#allocation2], %s165
        // Predicated region
        $region33: #{tpu_custom_call.1} parent=31 // pred_check
          %p167 = pneg %p41
        $region34: #{tpu_custom_call.1} parent=31 // pred_check_branch
          %169 = sbr.rel (%p167) target = $region36
        $region35: #{tpu_custom_call.1} parent=31 // pred_region
          %170 = dma.done %s163, 2048
        $region36: #{tpu_custom_call.1} parent=31 // pred_fallthru
          _
        %s171 = sand.u32 %s28, 1
        %s172 = scalar_lea.sflag [#allocation3], %s171
        %s173 = sand.u32 %s28, 1
        %s174 = smul.addr %s173, 128
        %s175 = scalar_lea.vmem [#allocation2], %s174
        %p176 = pneg %p41
        %p177 = pneg %p38
        %p178 = pneg %p62
        %p179 = pneg %p59
        %p180 = pneg %p83
        %p181 = pneg %p80
        %p182 = pneg %p109
        %p183 = pneg %p106
        %s184 = sand.u32 %s96, 1
        %s185 = scalar_lea.sflag [#allocation4], %s184
        %s186 = sand.u32 %s96, 1
        %s187 = smul.addr %s186, 128
        %s188 = scalar_lea.vmem [#allocation5], %s187
        %s189 = smul.u32 16, %s20
        %s190 = smul.u32 16, %s20
        %v191 = vld [vmem:[%s1] sm:$0xff]
        %v192 = vld [vmem:[%s1 + $0x8] sm:$0xff]
        %v193 = vld [vmem:[%s1 + $0x10] sm:$0xff]
        %v194 = vld [vmem:[%s1 + $0x18] sm:$0xff]
        %v195 = vld [vmem:[%s1 + $0x20] sm:$0xff]
        %v196 = vld [vmem:[%s1 + $0x28] sm:$0xff]
        %v197 = vld [vmem:[%s1 + $0x30] sm:$0xff]
        %v198 = vld [vmem:[%s1 + $0x38] sm:$0xff]
        %v199 = vld [vmem:[%s1 + $0x40] sm:$0xff]
        %v200 = vld [vmem:[%s1 + $0x48] sm:$0xff]
        %v201 = vld [vmem:[%s1 + $0x50] sm:$0xff]
        %v202 = vld [vmem:[%s1 + $0x58] sm:$0xff]
        %v203 = vld [vmem:[%s1 + $0x60] sm:$0xff]
        %v204 = vld [vmem:[%s1 + $0x68] sm:$0xff]
        %v205 = vld [vmem:[%s1 + $0x70] sm:$0xff]
        %v206 = vld [vmem:[%s1 + $0x78] sm:$0xff]
        %v207 = vld [vmem:[%s2] sm:$0xff]
        %v208 = vld [vmem:[%s166] sm:$0xff]
        %v209 = vld [vmem:[%s166 + $0x8] sm:$0xff]
        %v210 = vld [vmem:[%s166 + $0x10] sm:$0xff]
        %v211 = vld [vmem:[%s166 + $0x18] sm:$0xff]
        %v212 = vld [vmem:[%s166 + $0x20] sm:$0xff]
        %v213 = vld [vmem:[%s166 + $0x28] sm:$0xff]
        %v214 = vld [vmem:[%s166 + $0x30] sm:$0xff]
        %v215 = vld [vmem:[%s166 + $0x38] sm:$0xff]
        %v216 = vld [vmem:[%s166 + $0x40] sm:$0xff]
        %v217 = vld [vmem:[%s166 + $0x48] sm:$0xff]
        %v218 = vld [vmem:[%s166 + $0x50] sm:$0xff]
        %v219 = vld [vmem:[%s166 + $0x58] sm:$0xff]
        %v220 = vld [vmem:[%s166 + $0x60] sm:$0xff]
        %v221 = vld [vmem:[%s166 + $0x68] sm:$0xff]
        %v222 = vld [vmem:[%s166 + $0x70] sm:$0xff]
        %v223 = vld [vmem:[%s166 + $0x78] sm:$0xff]
        %224 = vmatprep.subr.mxu0 0.0
        %225 = vmatpush1.msra.mxu0 %v191
        %226 = vmatprep.subr.mxu0 0.0
        %227 = vmatpush1.msra.mxu0 %v192
        %228 = vmatprep.subr.mxu0 0.0
        %229 = vmatpush1.msra.mxu0 %v193
        %230 = vmatprep.subr.mxu0 0.0
        %231 = vmatpush1.msra.mxu0 %v194
        %232 = vmatprep.subr.mxu0 0.0
        %233 = vmatpush1.msra.mxu0 %v195
        %234 = vmatprep.subr.mxu0 0.0
        %235 = vmatpush1.msra.mxu0 %v196
        %236 = vmatprep.subr.mxu0 0.0
        %237 = vmatpush1.msra.mxu0 %v197
        %238 = vmatprep.subr.mxu0 0.0
        %239 = vmatpush1.msra.mxu0 %v198
        %240 = vmatprep.subr.mxu0 0.0
        %241 = vmatpush1.msra.mxu0 %v199
        %242 = vmatprep.subr.mxu0 0.0
        %243 = vmatpush1.msra.mxu0 %v200
        %244 = vmatprep.subr.mxu0 0.0
        %245 = vmatpush1.msra.mxu0 %v201
        %246 = vmatprep.subr.mxu0 0.0
        %247 = vmatpush1.msra.mxu0 %v202
        %248 = vmatprep.subr.mxu0 0.0
        %249 = vmatpush1.msra.mxu0 %v203
        %250 = vmatprep.subr.mxu0 0.0
        %251 = vmatpush1.msra.mxu0 %v204
        %252 = vmatprep.subr.mxu0 0.0
        %253 = vmatpush1.msra.mxu0 %v205
        %254 = vmatprep.subr.mxu0 0.0
        %255 = vmatpush1.msra.mxu0 %v206
        %256 = vmatprep.subr.mxu0 0.0
        %257 = vmatpush1.msra.mxu0 0.0
        %258 = vmatprep.subr.mxu0 0.0
        %259 = vmatpush1.msra.mxu0 0.0
        %260 = vmatprep.subr.mxu0 0.0
        %261 = vmatpush1.msra.mxu0 0.0
        %262 = vmatprep.subr.mxu0 0.0
        %263 = vmatpush1.msra.mxu0 0.0
        %264 = vmatprep.subr.mxu0 0.0
        %265 = vmatpush1.msra.mxu0 0.0
        %266 = vmatprep.subr.mxu0 0.0
        %267 = vmatpush1.msra.mxu0 0.0
        %268 = vmatprep.subr.mxu0 0.0
        %269 = vmatpush1.msra.mxu0 0.0
        %270 = vmatprep.subr.mxu0 0.0
        %271 = vmatpush1.msra.mxu0 0.0
        %272 = vmatprep.subr.mxu0 0.0
        %273 = vmatpush1.msra.mxu0 0.0
        %274 = vmatprep.subr.mxu0 0.0
        %275 = vmatpush1.msra.mxu0 0.0
        %276 = vmatprep.subr.mxu0 0.0
        %277 = vmatpush1.msra.mxu0 0.0
        %278 = vmatprep.subr.mxu0 0.0
        %279 = vmatpush1.msra.mxu0 0.0
        %280 = vmatprep.subr.mxu0 0.0
        %281 = vmatpush1.msra.mxu0 0.0
        %282 = vmatprep.subr.mxu0 0.0
        %283 = vmatpush1.msra.mxu0 0.0
        %284 = vmatprep.subr.mxu0 0.0
        %285 = vmatpush1.msra.mxu0 0.0
        %286 = vmatprep.subr.mxu0 0.0
        %287 = vmatpush1.msra.mxu0 0.0
        %288 = vmatprep.mubr.f32.mxu0 0.0
        %289 = vmatmul.mubr.f32.gmra.mrb[0].mxu0 %v208
        %v290 = vpop.f32.mrb[0].mxu0
        %v291 = vadd.f32 0.0, %v290
        %v292 = vpop.f32.mrb[0].mxu0
        %293 = vmatprep.mubr.f32.mxu0 0.0
        %294 = vmatmul.mubr.f32.gmra.mrb[0].mxu0 %v209
        %v295 = vpop.f32.mrb[0].mxu0
        %v296 = vadd.f32 0.0, %v295
        %v297 = vpop.f32.mrb[0].mxu0
        %298 = vmatprep.mubr.f32.mxu0 0.0
        %299 = vmatmul.mubr.f32.gmra.mrb[0].mxu0 %v210
        %v300 = vpop.f32.mrb[0].mxu0
        %v301 = vadd.f32 0.0, %v300
        %v302 = vpop.f32.mrb[0].mxu0
        %303 = vmatprep.mubr.f32.mxu0 0.0
        %304 = vmatmul.mubr.f32.gmra.mrb[0].mxu0 %v211
        %v305 = vpop.f32.mrb[0].mxu0
        %v306 = vadd.f32 0.0, %v305
        %v307 = vpop.f32.mrb[0].mxu0
        %308 = vmatprep.mubr.f32.mxu0 0.0
        %309 = vmatmul.mubr.f32.gmra.mrb[0].mxu0 %v212
        %v310 = vpop.f32.mrb[0].mxu0
        %v311 = vadd.f32 0.0, %v310
        %v312 = vpop.f32.mrb[0].mxu0
        %313 = vmatprep.mubr.f32.mxu0 0.0
        %314 = vmatmul.mubr.f32.gmra.mrb[0].mxu0 %v213
        %v315 = vpop.f32.mrb[0].mxu0
        %v316 = vadd.f32 0.0, %v315
        %v317 = vpop.f32.mrb[0].mxu0
        %318 = vmatprep.mubr.f32.mxu0 0.0
        %319 = vmatmul.mubr.f32.gmra.mrb[0].mxu0 %v214
        %v320 = vpop.f32.mrb[0].mxu0
        %v321 = vadd.f32 0.0, %v320
        %v322 = vpop.f32.mrb[0].mxu0
        %323 = vmatprep.mubr.f32.mxu0 0.0
        %324 = vmatmul.mubr.f32.gmra.mrb[0].mxu0 %v215
        %v325 = vpop.f32.mrb[0].mxu0
        %v326 = vadd.f32 0.0, %v325
        %v327 = vpop.f32.mrb[0].mxu0
        %328 = vmatprep.mubr.f32.mxu0 0.0
        %329 = vmatmul.mubr.f32.gmra.mrb[0].mxu0 %v216
        %v330 = vpop.f32.mrb[0].mxu0
        %v331 = vadd.f32 0.0, %v330
        %v332 = vpop.f32.mrb[0].mxu0
        %333 = vmatprep.mubr.f32.mxu0 0.0
        %334 = vmatmul.mubr.f32.gmra.mrb[0].mxu0 %v217
        %v335 = vpop.f32.mrb[0].mxu0
        %v336 = vadd.f32 0.0, %v335
        %v337 = vpop.f32.mrb[0].mxu0
        %338 = vmatprep.mubr.f32.mxu0 0.0
        %339 = vmatmul.mubr.f32.gmra.mrb[0].mxu0 %v218
        %v340 = vpop.f32.mrb[0].mxu0
        %v341 = vadd.f32 0.0, %v340
        %v342 = vpop.f32.mrb[0].mxu0
        %343 = vmatprep.mubr.f32.mxu0 0.0
        %344 = vmatmul.mubr.f32.gmra.mrb[0].mxu0 %v219
        %v345 = vpop.f32.mrb[0].mxu0
        %v346 = vadd.f32 0.0, %v345
        %v347 = vpop.f32.mrb[0].mxu0
        %348 = vmatprep.mubr.f32.mxu0 0.0
        %349 = vmatmul.mubr.f32.gmra.mrb[0].mxu0 %v220
        %v350 = vpop.f32.mrb[0].mxu0
        %v351 = vadd.f32 0.0, %v350
        %v352 = vpop.f32.mrb[0].mxu0
        %353 = vmatprep.mubr.f32.mxu0 0.0
        %354 = vmatmul.mubr.f32.gmra.mrb[0].mxu0 %v221
        %v355 = vpop.f32.mrb[0].mxu0
        %v356 = vadd.f32 0.0, %v355
        %v357 = vpop.f32.mrb[0].mxu0
        %358 = vmatprep.mubr.f32.mxu0 0.0
        %359 = vmatmul.mubr.f32.gmra.mrb[0].mxu0 %v222
        %v360 = vpop.f32.mrb[0].mxu0
        %v361 = vadd.f32 0.0, %v360
        %v362 = vpop.f32.mrb[0].mxu0
        %363 = vmatprep.mubr.f32.mxu0 0.0
        %364 = vmatmul.mubr.f32.gmra.mrb[0].mxu0 %v223
        %v365 = vpop.f32.mrb[0].mxu0
        %v366 = vadd.f32 0.0, %v365
        %v367 = vpop.f32.mrb[0].mxu0
        %368 = vdwg.mxu0
        %v369 = vmax.f32 %v291, 0.0
        %v370 = vmax.f32 %v296, 0.0
        %v371 = vmax.f32 %v301, 0.0
        %v372 = vmax.f32 %v306, 0.0
        %v373 = vmax.f32 %v311, 0.0
        %v374 = vmax.f32 %v316, 0.0
        %v375 = vmax.f32 %v321, 0.0
        %v376 = vmax.f32 %v326, 0.0
        %v377 = vmax.f32 %v331, 0.0
        %v378 = vmax.f32 %v336, 0.0
        %v379 = vmax.f32 %v341, 0.0
        %v380 = vmax.f32 %v346, 0.0
        %v381 = vmax.f32 %v351, 0.0
        %v382 = vmax.f32 %v356, 0.0
        %v383 = vmax.f32 %v361, 0.0
        %v384 = vmax.f32 %v366, 0.0
        %vm385 = vcmask 64512
        %v387 = vsel %vm385, %v369, 0
        %v390 = vsel %vm385, %v370, 0
        %v393 = vsel %vm385, %v371, 0
        %v396 = vsel %vm385, %v372, 0
        %v399 = vsel %vm385, %v373, 0
        %v402 = vsel %vm385, %v374, 0
        %v405 = vsel %vm385, %v375, 0
        %v408 = vsel %vm385, %v376, 0
        %v411 = vsel %vm385, %v377, 0
        %v414 = vsel %vm385, %v378, 0
        %v417 = vsel %vm385, %v379, 0
        %v420 = vsel %vm385, %v380, 0
        %v423 = vsel %vm385, %v381, 0
        %v426 = vsel %vm385, %v382, 0
        %v429 = vsel %vm385, %v383, 0
        %v432 = vsel %vm385, %v384, 0
        %434 = vmatprep.subr.mxu0 0.0
        %435 = vmatpush1.msra.mxu0 %v207
        %436 = vmatprep.subr.mxu0 0.0
        %437 = vmatpush1.msra.mxu0 0.0
        %438 = vmatprep.subr.mxu0 0.0
        %439 = vmatpush1.msra.mxu0 0.0
        %440 = vmatprep.subr.mxu0 0.0
        %441 = vmatpush1.msra.mxu0 0.0
        %442 = vmatprep.subr.mxu0 0.0
        %443 = vmatpush1.msra.mxu0 0.0
        %444 = vmatprep.subr.mxu0 0.0
        %445 = vmatpush1.msra.mxu0 0.0
        %446 = vmatprep.subr.mxu0 0.0
        %447 = vmatpush1.msra.mxu0 0.0
        %448 = vmatprep.subr.mxu0 0.0
        %449 = vmatpush1.msra.mxu0 0.0
        %450 = vmatprep.subr.mxu0 0.0
        %451 = vmatpush1.msra.mxu0 0.0
        %452 = vmatprep.subr.mxu0 0.0
        %453 = vmatpush1.msra.mxu0 0.0
        %454 = vmatprep.subr.mxu0 0.0
        %455 = vmatpush1.msra.mxu0 0.0
        %456 = vmatprep.subr.mxu0 0.0
        %457 = vmatpush1.msra.mxu0 0.0
        %458 = vmatprep.subr.mxu0 0.0
        %459 = vmatpush1.msra.mxu0 0.0
        %460 = vmatprep.subr.mxu0 0.0
        %461 = vmatpush1.msra.mxu0 0.0
        %462 = vmatprep.subr.mxu0 0.0
        %463 = vmatpush1.msra.mxu0 0.0
        %464 = vmatprep.subr.mxu0 0.0
        %465 = vmatpush1.msra.mxu0 0.0
        %466 = vmatprep.subr.mxu0 0.0
        %467 = vmatpush1.msra.mxu0 0.0
        %468 = vmatprep.subr.mxu0 0.0
        %469 = vmatpush1.msra.mxu0 0.0
        %470 = vmatprep.subr.mxu0 0.0
        %471 = vmatpush1.msra.mxu0 0.0
        %472 = vmatprep.subr.mxu0 0.0
        %473 = vmatpush1.msra.mxu0 0.0
        %474 = vmatprep.subr.mxu0 0.0
        %475 = vmatpush1.msra.mxu0 0.0
        %476 = vmatprep.subr.mxu0 0.0
        %477 = vmatpush1.msra.mxu0 0.0
        %478 = vmatprep.subr.mxu0 0.0
        %479 = vmatpush1.msra.mxu0 0.0
        %480 = vmatprep.subr.mxu0 0.0
        %481 = vmatpush1.msra.mxu0 0.0
        %482 = vmatprep.subr.mxu0 0.0
        %483 = vmatpush1.msra.mxu0 0.0
        %484 = vmatprep.subr.mxu0 0.0
        %485 = vmatpush1.msra.mxu0 0.0
        %486 = vmatprep.subr.mxu0 0.0
        %487 = vmatpush1.msra.mxu0 0.0
        %488 = vmatprep.subr.mxu0 0.0
        %489 = vmatpush1.msra.mxu0 0.0
        %490 = vmatprep.subr.mxu0 0.0
        %491 = vmatpush1.msra.mxu0 0.0
        %492 = vmatprep.subr.mxu0 0.0
        %493 = vmatpush1.msra.mxu0 0.0
        %494 = vmatprep.subr.mxu0 0.0
        %495 = vmatpush1.msra.mxu0 0.0
        %496 = vmatprep.subr.mxu0 0.0
        %497 = vmatpush1.msra.mxu0 0.0
        %498 = vmatprep.mubr.f32.mxu0 0.0
        %499 = vmatmul.mubr.f32.gmra.mrb[0].mxu0 %v387
        %v500 = vpop.f32.mrb[0].mxu0
        %v501 = vadd.f32 0.0, %v500
        %v502 = vpop.f32.mrb[0].mxu0
        %503 = vmatprep.mubr.f32.mxu0 0.0
        %504 = vmatmul.mubr.f32.gmra.mrb[0].mxu0 %v390
        %v505 = vpop.f32.mrb[0].mxu0
        %v506 = vadd.f32 0.0, %v505
        %v507 = vpop.f32.mrb[0].mxu0
        %508 = vmatprep.mubr.f32.mxu0 0.0
        %509 = vmatmul.mubr.f32.gmra.mrb[0].mxu0 %v393
        %v510 = vpop.f32.mrb[0].mxu0
        %v511 = vadd.f32 0.0, %v510
        %v512 = vpop.f32.mrb[0].mxu0
        %513 = vmatprep.mubr.f32.mxu0 0.0
        %514 = vmatmul.mubr.f32.gmra.mrb[0].mxu0 %v396
        %v515 = vpop.f32.mrb[0].mxu0
        %v516 = vadd.f32 0.0, %v515
        %v517 = vpop.f32.mrb[0].mxu0
        %518 = vmatprep.mubr.f32.mxu0 0.0
        %519 = vmatmul.mubr.f32.gmra.mrb[0].mxu0 %v399
        %v520 = vpop.f32.mrb[0].mxu0
        %v521 = vadd.f32 0.0, %v520
        %v522 = vpop.f32.mrb[0].mxu0
        %523 = vmatprep.mubr.f32.mxu0 0.0
        %524 = vmatmul.mubr.f32.gmra.mrb[0].mxu0 %v402
        %v525 = vpop.f32.mrb[0].mxu0
        %v526 = vadd.f32 0.0, %v525
        %v527 = vpop.f32.mrb[0].mxu0
        %528 = vmatprep.mubr.f32.mxu0 0.0
        %529 = vmatmul.mubr.f32.gmra.mrb[0].mxu0 %v405
        %v530 = vpop.f32.mrb[0].mxu0
        %v531 = vadd.f32 0.0, %v530
        %v532 = vpop.f32.mrb[0].mxu0
        %533 = vmatprep.mubr.f32.mxu0 0.0
        %534 = vmatmul.mubr.f32.gmra.mrb[0].mxu0 %v408
        %v535 = vpop.f32.mrb[0].mxu0
        %v536 = vadd.f32 0.0, %v535
        %v537 = vpop.f32.mrb[0].mxu0
        %538 = vmatprep.mubr.f32.mxu0 0.0
        %539 = vmatmul.mubr.f32.gmra.mrb[0].mxu0 %v411
        %v540 = vpop.f32.mrb[0].mxu0
        %v541 = vadd.f32 0.0, %v540
        %v542 = vpop.f32.mrb[0].mxu0
        %543 = vmatprep.mubr.f32.mxu0 0.0
        %544 = vmatmul.mubr.f32.gmra.mrb[0].mxu0 %v414
        %v545 = vpop.f32.mrb[0].mxu0
        %v546 = vadd.f32 0.0, %v545
        %v547 = vpop.f32.mrb[0].mxu0
        %548 = vmatprep.mubr.f32.mxu0 0.0
        %549 = vmatmul.mubr.f32.gmra.mrb[0].mxu0 %v417
        %v550 = vpop.f32.mrb[0].mxu0
        %v551 = vadd.f32 0.0, %v550
        %v552 = vpop.f32.mrb[0].mxu0
        %553 = vmatprep.mubr.f32.mxu0 0.0
        %554 = vmatmul.mubr.f32.gmra.mrb[0].mxu0 %v420
        %v555 = vpop.f32.mrb[0].mxu0
        %v556 = vadd.f32 0.0, %v555
        %v557 = vpop.f32.mrb[0].mxu0
        %558 = vmatprep.mubr.f32.mxu0 0.0
        %559 = vmatmul.mubr.f32.gmra.mrb[0].mxu0 %v423
        %v560 = vpop.f32.mrb[0].mxu0
        %v561 = vadd.f32 0.0, %v560
        %v562 = vpop.f32.mrb[0].mxu0
        %563 = vmatprep.mubr.f32.mxu0 0.0
        %564 = vmatmul.mubr.f32.gmra.mrb[0].mxu0 %v426
        %v565 = vpop.f32.mrb[0].mxu0
        %v566 = vadd.f32 0.0, %v565
        %v567 = vpop.f32.mrb[0].mxu0
        %568 = vmatprep.mubr.f32.mxu0 0.0
        %569 = vmatmul.mubr.f32.gmra.mrb[0].mxu0 %v429
        %v570 = vpop.f32.mrb[0].mxu0
        %v571 = vadd.f32 0.0, %v570
        %v572 = vpop.f32.mrb[0].mxu0
        %573 = vmatprep.mubr.f32.mxu0 0.0
        %574 = vmatmul.mubr.f32.gmra.mrb[0].mxu0 %v432
        %v575 = vpop.f32.mrb[0].mxu0
        %v576 = vadd.f32 0.0, %v575
        %v577 = vpop.f32.mrb[0].mxu0
        %578 = vdwg.mxu0
        %v579 = vmul.f32 %v501, 0.5
        %v580 = vmul.f32 %v506, 0.5
        %v581 = vmul.f32 %v511, 0.5
        %v582 = vmul.f32 %v516, 0.5
        %v583 = vmul.f32 %v521, 0.5
        %v584 = vmul.f32 %v526, 0.5
        %v585 = vmul.f32 %v531, 0.5
        %v586 = vmul.f32 %v536, 0.5
        %v587 = vmul.f32 %v541, 0.5
        %v588 = vmul.f32 %v546, 0.5
        %v589 = vmul.f32 %v551, 0.5
        %v590 = vmul.f32 %v556, 0.5
        %v591 = vmul.f32 %v561, 0.5
        %v592 = vmul.f32 %v566, 0.5
        %v593 = vmul.f32 %v571, 0.5
        %v594 = vmul.f32 %v576, 0.5
        %v595 = vtanh.pop %v579
        %v596 = vtanh.pop %v580
        %v597 = vtanh.pop %v581
        %v598 = vtanh.pop %v582
        %v599 = vtanh.pop %v583
        %v600 = vtanh.pop %v584
        %v601 = vtanh.pop %v585
        %v602 = vtanh.pop %v586
        %v603 = vtanh.pop %v587
        %v604 = vtanh.pop %v588
        %v605 = vtanh.pop %v589
        %v606 = vtanh.pop %v590
        %v607 = vtanh.pop %v591
        %v608 = vtanh.pop %v592
        %v609 = vtanh.pop %v593
        %v610 = vtanh.pop %v594
        %v611 = vadd.f32 %v595, 1.0
        %v612 = vadd.f32 %v596, 1.0
        %v613 = vadd.f32 %v597, 1.0
        %v614 = vadd.f32 %v598, 1.0
        %v615 = vadd.f32 %v599, 1.0
        %v616 = vadd.f32 %v600, 1.0
        %v617 = vadd.f32 %v601, 1.0
        %v618 = vadd.f32 %v602, 1.0
        %v619 = vadd.f32 %v603, 1.0
        %v620 = vadd.f32 %v604, 1.0
        %v621 = vadd.f32 %v605, 1.0
        %v622 = vadd.f32 %v606, 1.0
        %v623 = vadd.f32 %v607, 1.0
        %v624 = vadd.f32 %v608, 1.0
        %v625 = vadd.f32 %v609, 1.0
        %v626 = vadd.f32 %v610, 1.0
        %v627 = vmul.f32 %v611, 0.5
        %v628 = vmul.f32 %v612, 0.5
        %v629 = vmul.f32 %v613, 0.5
        %v630 = vmul.f32 %v614, 0.5
        %v631 = vmul.f32 %v615, 0.5
        %v632 = vmul.f32 %v616, 0.5
        %v633 = vmul.f32 %v617, 0.5
        %v634 = vmul.f32 %v618, 0.5
        %v635 = vmul.f32 %v619, 0.5
        %v636 = vmul.f32 %v620, 0.5
        %v637 = vmul.f32 %v621, 0.5
        %v638 = vmul.f32 %v622, 0.5
        %v639 = vmul.f32 %v623, 0.5
        %v640 = vmul.f32 %v624, 0.5
        %v641 = vmul.f32 %v625, 0.5
        %v642 = vmul.f32 %v626, 0.5
        %v643 = vmul.f32 %v627, %v208
        %v644 = vmul.f32 %v628, %v209
        %v645 = vmul.f32 %v629, %v210
        %v646 = vmul.f32 %v630, %v211
        %v647 = vmul.f32 %v631, %v212
        %v648 = vmul.f32 %v632, %v213
        %v649 = vmul.f32 %v633, %v214
        %v650 = vmul.f32 %v634, %v215
        %v651 = vmul.f32 %v635, %v216
        %v652 = vmul.f32 %v636, %v217
        %v653 = vmul.f32 %v637, %v218
        %v654 = vmul.f32 %v638, %v219
        %v655 = vmul.f32 %v639, %v220
        %v656 = vmul.f32 %v640, %v221
        %v657 = vmul.f32 %v641, %v222
        %v658 = vmul.f32 %v642, %v223
        %659 = vst [vmem:[%s188] sm:$0xff] %v643
        %660 = vst [vmem:[%s188 + $0x8] sm:$0xff] %v644
        %661 = vst [vmem:[%s188 + $0x10] sm:$0xff] %v645
        %662 = vst [vmem:[%s188 + $0x18] sm:$0xff] %v646
        %663 = vst [vmem:[%s188 + $0x20] sm:$0xff] %v647
        %664 = vst [vmem:[%s188 + $0x28] sm:$0xff] %v648
        %665 = vst [vmem:[%s188 + $0x30] sm:$0xff] %v649
        %666 = vst [vmem:[%s188 + $0x38] sm:$0xff] %v650
        %667 = vst [vmem:[%s188 + $0x40] sm:$0xff] %v651
        %668 = vst [vmem:[%s188 + $0x48] sm:$0xff] %v652
        %669 = vst [vmem:[%s188 + $0x50] sm:$0xff] %v653
        %670 = vst [vmem:[%s188 + $0x58] sm:$0xff] %v654
        %671 = vst [vmem:[%s188 + $0x60] sm:$0xff] %v655
        %672 = vst [vmem:[%s188 + $0x68] sm:$0xff] %v656
        %673 = vst [vmem:[%s188 + $0x70] sm:$0xff] %v657
        %674 = vst [vmem:[%s188 + $0x78] sm:$0xff] %v658
        %s675 = sand.u32 %s96, 1
        %s676 = scalar_lea.sflag [#allocation4], %s675
        %s677 = sand.u32 %s96, 1
        %s678 = smul.addr %s677, 128
        %s679 = scalar_lea.vmem [#allocation5], %s678
        // Predicated region
        $region37: #{tpu_custom_call.1} parent=31 // pred_check
          %p680 = pneg %p106
        $region38: #{tpu_custom_call.1} parent=31 // pred_check_branch
          %682 = sbr.rel (%p680) target = $region40
        $region39: #{tpu_custom_call.1} parent=31 // pred_region
          %s683 = smul.u32 16, %s20
          %s685 = ssub.s32 2048, 2048
          %686 = vsyncadd %s676, %s685
          %s687 = smul.addr %s683, 128
          %s688 = scalar_lea.hbm %s3, %s687
          %s689 = sshll.u32 %s679, 4
          %s690 = int_to_ptr.vmem [resolvable:$true] %s689
          %695 = dma.vmem_to_hbm [thread:$0]  %s690, 2048, %s688, %s676, 128, 128, 8
        $region40: #{tpu_custom_call.1} parent=31 // pred_fallthru
          _
      $region32: #{tpu_custom_call.1} parent=5 // pred_fallthru
        _
      %p696 = scmp.le.s32.totalorder 2, %s15
      // Predicated region
      $region41: #{tpu_custom_call.1} parent=5 // pred_check
        %p697 = pneg %p696
      $region42: #{tpu_custom_call.1} parent=5 // pred_check_branch
        %699 = sbr.rel (%p697) target = $region44
      $region43: #{tpu_custom_call.1} parent=5 // pred_region
        %s700 = ssub.s32 %s15, 2
        // Predicated region
        $region45: #{tpu_custom_call.1} parent=43 // pred_check
          %p701 = pneg %p112
        $region46: #{tpu_custom_call.1} parent=43 // pred_check_branch
          %703 = sbr.rel (%p701) target = $region48
        $region47: #{tpu_custom_call.1} parent=43 // pred_region
          %s704 = sand.u32 %s97, 1
          %s705 = scalar_lea.sflag [#allocation4], %s704
          %s706 = sand.u32 %s97, 1
          %s707 = smul.addr %s706, 128
          %s708 = scalar_lea.vmem [#allocation5], %s707
          %709 = dma.done %s705, 2048
        $region48: #{tpu_custom_call.1} parent=43 // pred_fallthru
          _
      $region44: #{tpu_custom_call.1} parent=5 // pred_fallthru
        _
    $region6: #{tpu_custom_call.1} parent=1 // loop_footer
      %s19 = sadd.s32 1, %s15
    $region7: #{tpu_custom_call.1} parent=1 // loop_footer_branch
      %14 = sbr.rel target = $region3
    $region8: #{tpu_custom_call.1} parent=1 // loop_exit
      _
    %710 = vsyncpa [#allocation3], 1
    %s711 = scalar_lea.sflag [#allocation3], 1
    %712 = vsyncpa %s711, 1
    %713 = vsyncpa [#allocation4], 1
    %s714 = scalar_lea.sflag [#allocation4], 1
    %715 = vsyncpa %s714, 1

</llo_original>
